<compile_context>
chip_gen: v6e
topology: v6e:2x2x1
jax: 0.10.0
libtpu: 0.0.40
codegen_flags: <defaults>
</compile_context>

<pallas_src>
import functools
import math

import jax
import jax.numpy as jnp
from jax import lax
from jax.experimental import pallas as pl
from jax.experimental.pallas import tpu as pltpu


# --------------------------------------------------------------------------- #
# Flash-style attention kernel                                                 #
# --------------------------------------------------------------------------- #
def _flash_attn_kernel(q_ref, k_ref, v_ref, mask_ref, o_ref,
                       m_sc, l_sc, acc_sc, *, compute_dtype):
    """One (head-group, q-tile, kv-tile) step of online-softmax attention.

    q block:    (G, TQ, Dh)  -- already scaled by 1/sqrt(Dh) in the wrapper
    k/v block:  (G, TK, Dh)
    mask block: (TQ, TK)     -- additive, broadcast over the group
    scratch:    m (G,TQ,1), l (G,TQ,1), acc (G,TQ,Dh), all f32
    """
    kv = pl.program_id(2)

    @pl.when(kv == 0)
    def _init():
        m_sc[...] = jnp.full(m_sc.shape, -jnp.inf, dtype=m_sc.dtype)
        l_sc[...] = jnp.zeros(l_sc.shape, dtype=l_sc.dtype)
        acc_sc[...] = jnp.zeros(acc_sc.shape, dtype=acc_sc.dtype)

    # scores = q @ k^T per slice; contraction on the last axes (MXU consumes
    # the operands directly, no transpose / relayout).  f32 accumulation.
    s = jnp.einsum("gqd,gkd->gqk", q_ref[...], k_ref[...],
                   preferred_element_type=jnp.float32)
    s = s + mask_ref[...].astype(jnp.float32)        # additive mask, bcast over g

    # Online softmax update.
    m_prev = m_sc[...]
    m_new = jnp.maximum(m_prev, jnp.max(s, axis=-1, keepdims=True))
    alpha = jnp.exp(m_prev - m_new)                  # EUP
    p = jnp.exp(s - m_new)                           # EUP

    l_sc[...] = alpha * l_sc[...] + jnp.sum(p, axis=-1, keepdims=True)
    acc_sc[...] = alpha * acc_sc[...] + jnp.einsum(
        "gqk,gkd->gqd", p.astype(compute_dtype), v_ref[...],
        preferred_element_type=jnp.float32)
    m_sc[...] = m_new

    @pl.when(kv == pl.num_programs(2) - 1)
    def _finalize():
        inv_l = pl.reciprocal(l_sc[...], approx=False)   # exact: fp parity
        o_ref[...] = (acc_sc[...] * inv_l).astype(o_ref.dtype)


# --------------------------------------------------------------------------- #
# Output projection kernel                                                     #
# --------------------------------------------------------------------------- #
def _linear_kernel(x_ref, wt_ref, b_ref, o_ref):
    """torch.nn.Linear: out = x @ W^T + b, with W pre-transposed in the wrapper
    so the kernel runs the canonical (M,K)x(K,N) contraction (no relayout)."""
    acc = lax.dot_general(
        x_ref[...], wt_ref[...],
        dimension_numbers=(((1,), (0,)), ((), ())),
        preferred_element_type=jnp.float32)
    o_ref[...] = (acc + b_ref[...].astype(jnp.float32)).astype(o_ref.dtype)


# --------------------------------------------------------------------------- #
# Tile / VMEM budgeting helpers                                                #
# --------------------------------------------------------------------------- #
def _pick_tile(dim, cap, quantum):
    """Largest tile <= cap that is a multiple of `quantum` and divides `dim`;
    falls back to the full dim (a full-extent block is always legal)."""
    if dim <= cap:
        return dim
    t = (cap // quantum) * quantum
    while t >= quantum:
        if dim % t == 0:
            return t
        t -= quantum
    return dim


def _pick_group(total, cap):
    """Largest divisor of `total` that is <= cap (leading block dim)."""
    g = max(1, min(cap, total))
    while total % g:
        g -= 1
    return g


def _vmem_limit(*nbytes):
    """Scoped-VMEM request: double-buffered blocks + headroom for temporaries,
    clamped to [32 MiB, 64 MiB] (64 MiB = v7x physical ceiling)."""
    need = 4 * sum(int(n) for n in nbytes)
    return int(max(32 << 20, min(64 << 20, need)))


# --------------------------------------------------------------------------- #
# Wrapper                                                                      #
# --------------------------------------------------------------------------- #
def multi_head_attention(q, k, v, mask, w, b, *, dmodel, heads,
                         compute_dtype=jnp.bfloat16,
                         head_group=8, q_tile=256, kv_tile=256,
                         row_tile=512, col_tile=512):
    B, S, D = q.shape
    assert D == dmodel and D % heads == 0
    Dh = D // heads
    BH = B * heads
    out_dtype = q.dtype
    inv_scale = 1.0 / math.sqrt(dmodel // heads)

    # Head split: row-major reshape identical to torch.reshape(B, heads, S, Dh)
    # with (B, heads) collapsed (free layout op).  Fold the 1/sqrt(Dh) scale
    # into q once and cast the MXU operands to the compute dtype (bf16) here so
    # the DMA streams are half-width.
    qh = (q.reshape(BH, S, Dh) * inv_scale).astype(compute_dtype)
    kh = k.reshape(BH, S, Dh).astype(compute_dtype)
    vh = v.reshape(BH, S, Dh).astype(compute_dtype)

    # ---- flash tiling -------------------------------------------------------
    TQ = _pick_tile(S, q_tile, 8)          # sublane-quantized
    TK = _pick_tile(S, kv_tile, 128)       # lane-quantized
    # Cap the head-group so the leading "parallel" axis has >= 2 (ideally >= 4)
    # iterations: keeps both v7x TensorCores busy and gives the BlockSpec
    # pipeline grid steps to overlap DMA with compute.
    G = _pick_group(BH, min(head_group, max(1, BH // 4)))
    grid_attn = (BH // G, S // TQ, S // TK)

    cbytes = jnp.dtype(compute_dtype).itemsize
    attn_vmem = _vmem_limit(
        G * TQ * Dh * cbytes,                  # q block
        2 * G * TK * Dh * cbytes,              # k + v blocks
        TQ * TK * jnp.dtype(mask.dtype).itemsize,   # mask tile
        G * TQ * Dh * cbytes,                  # out block
        G * TQ * (Dh + 2) * 4,                 # f32 scratch (acc, m, l)
        2 * G * TQ * TK * 4,                   # f32 score / p temporaries
    )

    attn_out = pl.pallas_call(
        functools.partial(_flash_attn_kernel, compute_dtype=compute_dtype),
        out_shape=jax.ShapeDtypeStruct((BH, S, Dh), compute_dtype),
        grid_spec=pltpu.PrefetchScalarGridSpec(
            num_scalar_prefetch=0,
            grid=grid_attn,
            in_specs=[
                pl.BlockSpec((G, TQ, Dh), lambda g, qi, ki: (g, qi, 0)),
                pl.BlockSpec((G, TK, Dh), lambda g, qi, ki: (g, ki, 0)),
                pl.BlockSpec((G, TK, Dh), lambda g, qi, ki: (g, ki, 0)),
                pl.BlockSpec((TQ, TK), lambda g, qi, ki: (qi, ki)),
            ],
            out_specs=pl.BlockSpec((G, TQ, Dh), lambda g, qi, ki: (g, qi, 0)),
            scratch_shapes=[
                pltpu.VMEM((G, TQ, 1), jnp.float32),    # running max
                pltpu.VMEM((G, TQ, 1), jnp.float32),    # running sum
                pltpu.VMEM((G, TQ, Dh), jnp.float32),   # accumulator
            ],
        ),
        compiler_params=pltpu.CompilerParams(
            dimension_semantics=("parallel", "parallel", "arbitrary"),
            vmem_limit_bytes=attn_vmem,
        ),
    )(qh, kh, vh, mask)

    # Head merge: x.view(B, S, dmodel) in torch == row-major reshape; the
    # (BH, S, Dh) and (B*S, D) layouts share the same flat ordering -> free.
    # The intermediate stays in compute_dtype (bf16) to halve the HBM round trip.
    BS = B * S
    x2d = attn_out.reshape(BS, D)

    # ---- output projection: out = x @ W^T + b -------------------------------
    # One-time XLA transpose of the resident weight; bf16 storage; N-tiled so
    # it stays double-bufferable at real model widths.
    wt = jnp.asarray(w).T.astype(compute_dtype)              # (Din, Dout)
    b2d = jnp.asarray(b).reshape(1, D).astype(jnp.float32)

    TM = _pick_tile(BS, min(row_tile, max(8, BS // 2)), 8)    # >= 2 M steps
    TN = _pick_tile(D, col_tile, 128)
    grid_lin = (D // TN, BS // TM)     # N outermost so the weight tile stays put

    lin_vmem = _vmem_limit(
        TM * D * cbytes,                           # activation block
        D * TN * cbytes,                           # weight tile
        TN * 4,                                    # bias tile
        TM * TN * (4 + jnp.dtype(out_dtype).itemsize),   # f32 acc + out block
    )

    out = pl.pallas_call(
        _linear_kernel,
        out_shape=jax.ShapeDtypeStruct((BS, D), out_dtype),
        grid_spec=pltpu.PrefetchScalarGridSpec(
            num_scalar_prefetch=0,
            grid=grid_lin,
            in_specs=[
                pl.BlockSpec((TM, D), lambda j, i: (i, 0)),   # activations (stream)
                pl.BlockSpec((D, TN), lambda j, i: (0, j)),   # weight tile (resident per j)
                pl.BlockSpec((1, TN), lambda j, i: (0, j)),   # bias tile
            ],
            out_specs=pl.BlockSpec((TM, TN), lambda j, i: (i, j)),
        ),
        compiler_params=pltpu.CompilerParams(
            dimension_semantics=("parallel", "parallel"),
            vmem_limit_bytes=lin_vmem,
        ),
    )(x2d, wt, b2d)

    return out.reshape(B, S, D)


# --------------------------------------------------------------------------- #
# Pure-JAX mirror of the PyTorch forward for validation                        #
# --------------------------------------------------------------------------- #
def _reference(q, k, v, mask, w, b, *, dmodel, heads):
    B, S, D = q.shape
    Dh = D // heads
    qh = q.reshape(B, heads, S, Dh)
    kh = k.reshape(B, heads, S, Dh)
    vh = v.reshape(B, heads, S, Dh)
    attn = jnp.einsum("bhqd,bhkd->bhqk", qh, kh) / math.sqrt(dmodel // heads)
    attn = attn + mask
    p = jax.nn.softmax(attn, axis=3)
    vals = jnp.einsum("bhqk,bhkd->bhqd", p, vh)
    x = vals.reshape(B, S, D)
    return x @ w.T + b


if __name__ == "__main__":
    B, S, dmodel, heads = 2, 8, 32, 4

    key = jax.random.PRNGKey(0)
    kq, kk, kv_, kw, kb = jax.random.split(key, 5)

    q = jax.random.normal(kq, (B, S, dmodel), dtype=jnp.float32)
    k = jax.random.normal(kk, (B, S, dmodel), dtype=jnp.float32)
    v = jax.random.normal(kv_, (B, S, dmodel), dtype=jnp.float32)

    # Additive causal mask (0 on/below diagonal, large negative above),
    # broadcast over batch and heads just like `attention += mask` in torch.
    mask = jnp.where(
        jnp.tril(jnp.ones((S, S), dtype=jnp.bool_)), 0.0, -1e9
    ).astype(jnp.float32)

    # Deterministic nn.Linear(dmodel, dmodel)-style init (uniform +-1/sqrt(dmodel)).
    bound = 1.0 / math.sqrt(dmodel)
    w = jax.random.uniform(kw, (dmodel, dmodel), jnp.float32, -bound, bound)
    b = jax.random.uniform(kb, (dmodel,), jnp.float32, -bound, bound)

    ref = _reference(q, k, v, mask, w, b, dmodel=dmodel, heads=heads)

    # f32 compute path: tight fp parity with the PyTorch module.
    out_f32 = multi_head_attention(q, k, v, mask, w, b, dmodel=dmodel,
                                   heads=heads, compute_dtype=jnp.float32)
    out_f32 = jax.block_until_ready(out_f32)
    assert out_f32.shape == (B, S, dmodel)
    assert jnp.allclose(out_f32, ref, atol=5e-3, rtol=5e-3), "f32 mismatch vs reference"

    # Default bf16-MXU path (f32 accumulation): relaxed tolerance — bf16 operand
    # rounding gives O(1e-2) differences; semantic errors would be O(0.1..1).
    out_bf16 = multi_head_attention(q, k, v, mask, w, b, dmodel=dmodel, heads=heads)
    out_bf16 = jax.block_until_ready(out_bf16)
    assert out_bf16.shape == (B, S, dmodel)
    assert jnp.allclose(out_bf16, ref, atol=5e-2, rtol=5e-2), "bf16 mismatch vs reference"

    print("KERNEL_OK")
</pallas_src>

<mosaic_0001>
module attributes {stable_mosaic.version = 11 : i64} {
  func.func @_flash_attn_kernel(%arg0: i32, %arg1: i32, %arg2: i32, %arg3: memref<2x8x8xf32, #tpu.memory_space<vmem>>, %arg4: memref<2x8x8xf32, #tpu.memory_space<vmem>>, %arg5: memref<2x8x8xf32, #tpu.memory_space<vmem>>, %arg6: memref<8x8xf32, #tpu.memory_space<vmem>>, %arg7: memref<2x8x8xf32, #tpu.memory_space<vmem>>, %arg8: memref<2x8x1xf32, #tpu.memory_space<vmem>>, %arg9: memref<2x8x1xf32, #tpu.memory_space<vmem>>, %arg10: memref<2x8x8xf32, #tpu.memory_space<vmem>>) attributes {dimension_semantics = [#tpu.dimension_semantics<parallel>, #tpu.dimension_semantics<parallel>, #tpu.dimension_semantics<arbitrary>], iteration_bounds = array<i64: 4, 1, 1>, scalar_prefetch = 0 : i64, scratch_operands = 3 : i64, tpu.core_type = #tpu.core_type<tc>, window_params = [{transform_indices = @transform_0, window_bounds = array<i64: 2, 8, 8>}, {transform_indices = @transform_1, window_bounds = array<i64: 2, 8, 8>}, {transform_indices = @transform_2, window_bounds = array<i64: 2, 8, 8>}, {transform_indices = @transform_3, window_bounds = array<i64: 8, 8>}, {transform_indices = @transform_4, window_bounds = array<i64: 2, 8, 8>}]} {
    %c0_i32 = arith.constant 0 : i32
    %0 = arith.cmpi eq, %arg2, %c0_i32 : i32
    %1 = arith.extui %0 : i1 to i32
    %c0_i32_0 = arith.constant 0 : i32
    %2 = arith.cmpi ne, %1, %c0_i32_0 : i32
    scf.if %2 {
      %cst_34 = arith.constant 0xFF800000 : f32
      %36 = vector.broadcast %cst_34 : f32 to vector<2x8x1xf32>
      %c0_35 = arith.constant 0 : index
      %c0_36 = arith.constant 0 : index
      %c0_37 = arith.constant 0 : index
      %37 = vector.load %arg8[%c0_35, %c0_36, %c0_37] : memref<2x8x1xf32, #tpu.memory_space<vmem>>, vector<2x8x1xf32>
      tpu.vector_store %arg8[%c0_35, %c0_36, %c0_37], %36 {strides = array<i32>} : memref<2x8x1xf32, #tpu.memory_space<vmem>>, vector<2x8x1xf32>,
      %cst_38 = arith.constant 0.000000e+00 : f32
      %38 = vector.broadcast %cst_38 : f32 to vector<2x8x1xf32>
      %c0_39 = arith.constant 0 : index
      %c0_40 = arith.constant 0 : index
      %c0_41 = arith.constant 0 : index
      %39 = vector.load %arg9[%c0_39, %c0_40, %c0_41] : memref<2x8x1xf32, #tpu.memory_space<vmem>>, vector<2x8x1xf32>
      tpu.vector_store %arg9[%c0_39, %c0_40, %c0_41], %38 {strides = array<i32>} : memref<2x8x1xf32, #tpu.memory_space<vmem>>, vector<2x8x1xf32>,
      %cst_42 = arith.constant 0.000000e+00 : f32
      %40 = vector.broadcast %cst_42 : f32 to vector<2x8x8xf32>
      %c0_43 = arith.constant 0 : index
      %c0_44 = arith.constant 0 : index
      %c0_45 = arith.constant 0 : index
      %41 = vector.load %arg10[%c0_43, %c0_44, %c0_45] : memref<2x8x8xf32, #tpu.memory_space<vmem>>, vector<2x8x8xf32>
      tpu.vector_store %arg10[%c0_43, %c0_44, %c0_45], %40 {strides = array<i32>} : memref<2x8x8xf32, #tpu.memory_space<vmem>>, vector<2x8x8xf32>,
    } else {
    }
    %c0 = arith.constant 0 : index
    %c0_1 = arith.constant 0 : index
    %c0_2 = arith.constant 0 : index
    %3 = vector.load %arg3[%c0, %c0_1, %c0_2] : memref<2x8x8xf32, #tpu.memory_space<vmem>>, vector<2x8x8xf32>
    %c0_3 = arith.constant 0 : index
    %c0_4 = arith.constant 0 : index
    %c0_5 = arith.constant 0 : index
    %4 = vector.load %arg4[%c0_3, %c0_4, %c0_5] : memref<2x8x8xf32, #tpu.memory_space<vmem>>, vector<2x8x8xf32>
    "tpu.trace_start"() <{level = 10 : i32, message = "gqd,gkd->gqk"}> : () -> ()
    %cst = arith.constant dense<0.000000e+00> : vector<2x8x8xf32>
    %5 = tpu.matmul %3, %4, %cst {dimension_numbers = #tpu.dot_dimension_numbers<[2], [2], [1], [1], [0, 0, 0, 1, 1, 1], [0], [0]>} : vector<2x8x8xf32>, vector<2x8x8xf32>, vector<2x8x8xf32> -> vector<2x8x8xf32>
    "tpu.trace_stop"() : () -> ()
    %c0_6 = arith.constant 0 : index
    %c0_7 = arith.constant 0 : index
    %6 = vector.load %arg6[%c0_6, %c0_7] : memref<8x8xf32, #tpu.memory_space<vmem>>, vector<8x8xf32>
    %7 = vector.shape_cast %6 : vector<8x8xf32> to vector<1x8x8xf32>
    %8 = vector.broadcast %7 : vector<1x8x8xf32> to vector<2x8x8xf32>
    %9 = arith.addf %5, %8 : vector<2x8x8xf32>
    %c0_8 = arith.constant 0 : index
    %c0_9 = arith.constant 0 : index
    %c0_10 = arith.constant 0 : index
    %10 = vector.load %arg8[%c0_8, %c0_9, %c0_10] : memref<2x8x1xf32, #tpu.memory_space<vmem>>, vector<2x8x1xf32>
    %cst_11 = arith.constant dense<0xFF800000> : vector<2x8xf32>
    %11 = vector.multi_reduction <maximumf>, %9, %cst_11 [2] : vector<2x8x8xf32> to vector<2x8xf32>
    %12 = vector.shape_cast %11 : vector<2x8xf32> to vector<2x8x1xf32>
    %13 = arith.maximumf %10, %12 : vector<2x8x1xf32>
    %14 = arith.subf %10, %13 : vector<2x8x1xf32>
    %15 = math.exp %14 : vector<2x8x1xf32>
    %16 = vector.broadcast %13 : vector<2x8x1xf32> to vector<2x8x8xf32>
    %17 = arith.subf %9, %16 : vector<2x8x8xf32>
    %18 = math.exp %17 : vector<2x8x8xf32>
    %c0_12 = arith.constant 0 : index
    %c0_13 = arith.constant 0 : index
    %c0_14 = arith.constant 0 : index
    %19 = vector.load %arg9[%c0_12, %c0_13, %c0_14] : memref<2x8x1xf32, #tpu.memory_space<vmem>>, vector<2x8x1xf32>
    %20 = arith.mulf %15, %19 : vector<2x8x1xf32>
    %cst_15 = arith.constant dense<0.000000e+00> : vector<2x8xf32>
    %21 = vector.multi_reduction <add>, %18, %cst_15 [2] : vector<2x8x8xf32> to vector<2x8xf32>
    %22 = vector.shape_cast %21 : vector<2x8xf32> to vector<2x8x1xf32>
    %23 = arith.addf %20, %22 : vector<2x8x1xf32>
    %c0_16 = arith.constant 0 : index
    %c0_17 = arith.constant 0 : index
    %c0_18 = arith.constant 0 : index
    %24 = vector.load %arg9[%c0_16, %c0_17, %c0_18] : memref<2x8x1xf32, #tpu.memory_space<vmem>>, vector<2x8x1xf32>
    tpu.vector_store %arg9[%c0_16, %c0_17, %c0_18], %23 {strides = array<i32>} : memref<2x8x1xf32, #tpu.memory_space<vmem>>, vector<2x8x1xf32>,
    %c0_19 = arith.constant 0 : index
    %c0_20 = arith.constant 0 : index
    %c0_21 = arith.constant 0 : index
    %25 = vector.load %arg10[%c0_19, %c0_20, %c0_21] : memref<2x8x8xf32, #tpu.memory_space<vmem>>, vector<2x8x8xf32>
    %26 = vector.broadcast %15 : vector<2x8x1xf32> to vector<2x8x8xf32>
    %27 = arith.mulf %26, %25 : vector<2x8x8xf32>
    %c0_22 = arith.constant 0 : index
    %c0_23 = arith.constant 0 : index
    %c0_24 = arith.constant 0 : index
    %28 = vector.load %arg5[%c0_22, %c0_23, %c0_24] : memref<2x8x8xf32, #tpu.memory_space<vmem>>, vector<2x8x8xf32>
    "tpu.trace_start"() <{level = 10 : i32, message = "gqk,gkd->gqd"}> : () -> ()
    %cst_25 = arith.constant dense<0.000000e+00> : vector<2x8x8xf32>
    %29 = tpu.matmul %18, %28, %cst_25 {dimension_numbers = #tpu.dot_dimension_numbers<[2], [1], [1], [2], [0, 0, 0, 1, 1, 2], [0], [0]>} : vector<2x8x8xf32>, vector<2x8x8xf32>, vector<2x8x8xf32> -> vector<2x8x8xf32>
    "tpu.trace_stop"() : () -> ()
    %30 = arith.addf %27, %29 : vector<2x8x8xf32>
    %c0_26 = arith.constant 0 : index
    %c0_27 = arith.constant 0 : index
    %c0_28 = arith.constant 0 : index
    %31 = vector.load %arg10[%c0_26, %c0_27, %c0_28] : memref<2x8x8xf32, #tpu.memory_space<vmem>>, vector<2x8x8xf32>
    tpu.vector_store %arg10[%c0_26, %c0_27, %c0_28], %30 {strides = array<i32>} : memref<2x8x8xf32, #tpu.memory_space<vmem>>, vector<2x8x8xf32>,
    %c0_29 = arith.constant 0 : index
    %c0_30 = arith.constant 0 : index
    %c0_31 = arith.constant 0 : index
    %32 = vector.load %arg8[%c0_29, %c0_30, %c0_31] : memref<2x8x1xf32, #tpu.memory_space<vmem>>, vector<2x8x1xf32>
    tpu.vector_store %arg8[%c0_29, %c0_30, %c0_31], %13 {strides = array<i32>} : memref<2x8x1xf32, #tpu.memory_space<vmem>>, vector<2x8x1xf32>,
    %c0_i32_32 = arith.constant 0 : i32
    %33 = arith.cmpi eq, %arg2, %c0_i32_32 : i32
    %34 = arith.extui %33 : i1 to i32
    %c0_i32_33 = arith.constant 0 : i32
    %35 = arith.cmpi ne, %34, %c0_i32_33 : i32
    scf.if %35 {
      %c0_34 = arith.constant 0 : index
      %c0_35 = arith.constant 0 : index
      %c0_36 = arith.constant 0 : index
      %36 = vector.load %arg9[%c0_34, %c0_35, %c0_36] : memref<2x8x1xf32, #tpu.memory_space<vmem>>, vector<2x8x1xf32>
      %37 = tpu.reciprocal %36 : vector<2x8x1xf32> -> vector<2x8x1xf32>
      %c0_37 = arith.constant 0 : index
      %c0_38 = arith.constant 0 : index
      %c0_39 = arith.constant 0 : index
      %38 = vector.load %arg10[%c0_37, %c0_38, %c0_39] : memref<2x8x8xf32, #tpu.memory_space<vmem>>, vector<2x8x8xf32>
      %39 = vector.broadcast %37 : vector<2x8x1xf32> to vector<2x8x8xf32>
      %40 = arith.mulf %38, %39 : vector<2x8x8xf32>
      %c0_40 = arith.constant 0 : index
      %c0_41 = arith.constant 0 : index
      %c0_42 = arith.constant 0 : index
      %41 = vector.load %arg7[%c0_40, %c0_41, %c0_42] : memref<2x8x8xf32, #tpu.memory_space<vmem>>, vector<2x8x8xf32>
      tpu.vector_store %arg7[%c0_40, %c0_41, %c0_42], %40 {strides = array<i32>} : memref<2x8x8xf32, #tpu.memory_space<vmem>>, vector<2x8x8xf32>,
    } else {
    }
    return
  }
  func.func @transform_0(%arg0: i32, %arg1: i32, %arg2: i32) -> (i32, i32, i32) {
    %c0_i32 = arith.constant 0 : i32
    %c0_i32_0 = arith.constant 0 : i32
    return %arg0, %arg1, %c0_i32 : i32, i32, i32
  }
  func.func @transform_1(%arg0: i32, %arg1: i32, %arg2: i32) -> (i32, i32, i32) {
    %c0_i32 = arith.constant 0 : i32
    %c0_i32_0 = arith.constant 0 : i32
    return %arg0, %arg2, %c0_i32 : i32, i32, i32
  }
  func.func @transform_2(%arg0: i32, %arg1: i32, %arg2: i32) -> (i32, i32, i32) {
    %c0_i32 = arith.constant 0 : i32
    %c0_i32_0 = arith.constant 0 : i32
    return %arg0, %arg2, %c0_i32 : i32, i32, i32
  }
  func.func @transform_3(%arg0: i32, %arg1: i32, %arg2: i32) -> (i32, i32) {
    %c0_i32 = arith.constant 0 : i32
    return %arg1, %arg2 : i32, i32
  }
  func.func @transform_4(%arg0: i32, %arg1: i32, %arg2: i32) -> (i32, i32, i32) {
    %c0_i32 = arith.constant 0 : i32
    %c0_i32_0 = arith.constant 0 : i32
    return %arg0, %arg1, %c0_i32 : i32, i32, i32
  }
}

</mosaic_0001>

<llo_original>
// kernel: tpu_custom_call.1
$region0: #{tpu_custom_call.1}
  #allocation0 [shape = 'u32[]', space=smem, size = 0x4, offset = 0x4, fixed_abs, tag = 'smem constant byte address 0x4 - core index']
  #allocation1 [shape = 'u32[144,128]{1,0:T(1,128)}', space=vmem, size = 0x12000, scoped, tag = 'internal scratch']
  #allocation2 [shape = 'f32[2,8,1]{2,1,0:T(8,128)}', space=vmem, size = 0x2000, scoped, tag = 'scratch operand']
  #allocation3 [shape = 'f32[2,8,1]{2,1,0:T(8,128)}', space=vmem, size = 0x2000, scoped, tag = 'scratch operand']
  #allocation4 [shape = 'f32[2,8,8]{2,1,0:T(8,128)}', space=vmem, size = 0x2000, scoped, tag = 'scratch operand']
  %s0 = inlined_call_operand.hbm [shape: f32[8,8,8], index: 0, kind: input, shape index: {}]
  %s1 = inlined_call_operand.hbm [shape: f32[8,8,8], index: 1, kind: input, shape index: {}]
  %s2 = inlined_call_operand.hbm [shape: f32[8,8,8], index: 2, kind: input, shape index: {}]
  %s3 = inlined_call_operand.hbm [shape: f32[8,8], index: 3, kind: input, shape index: {}]
  %s4 = inlined_call_operand.hbm [shape: f32[8,8,8], index: 4, kind: output, shape index: {}]
  %s5 = sld [smem:[#allocation0]]
  $region73: #{tpu_custom_call.1} parent=0
    _
  %s7 = ssub.s32 1, %s5
  %s8 = scalar_select 0, %s7, %s5
  $region1: #{tpu_custom_call.1} parent=0
    #allocation5 [shape = 'u8[16384]{0}', space=vmem, size = 0x4000, scoped, tag = 'input window, operand 0']
    #allocation6 [shape = 's32[2]{0}', space=sflag, size = 0x8, scoped, tag = 'scoped memory for tpu_custom_call.1']
    #allocation7 [shape = 's32[2]{0}', space=sflag, size = 0x8, scoped, tag = 'scoped memory for tpu_custom_call.1']
    #allocation8 [shape = 'u8[16384]{0}', space=vmem, size = 0x4000, scoped, tag = 'input window, operand 1']
    #allocation9 [shape = 's32[2]{0}', space=sflag, size = 0x8, scoped, tag = 'scoped memory for tpu_custom_call.1']
    #allocation10 [shape = 'u8[16384]{0}', space=vmem, size = 0x4000, scoped, tag = 'input window, operand 2']
    #allocation11 [shape = 'u8[4096]{0}', space=vmem, size = 0x1000, scoped, tag = 'input window, operand 3, single buffered']
    #allocation12 [shape = 's32[1]{0}', space=sflag, size = 0x4, scoped, tag = 'scoped memory for tpu_custom_call.1']
    #allocation13 [shape = 'u8[16384]{0}', space=vmem, size = 0x4000, scoped, tag = 'output window, operand 0']
    %9 = vsyncpa [#allocation6], 0
    %s10 = scalar_lea.sflag [#allocation6], 1
    %11 = vsyncpa %s10, 0
    %12 = vsyncpa [#allocation9], 0
    %s13 = scalar_lea.sflag [#allocation9], 1
    %14 = vsyncpa %s13, 0
    %15 = vsyncpa [#allocation12], 0
    %16 = vsyncpa [#allocation7], 0
    %s17 = scalar_lea.sflag [#allocation7], 1
    %18 = vsyncpa %s17, 0
    loop: start=0, step=1, limit=6
    $region2: #{tpu_custom_call.1} parent=1 // loop_pre_header
      _
    $region3: #{tpu_custom_call.1} parent=1 // loop_header
      %s20 = sphi 0, %s24
      %p21 = scmp.ge.s32.totalorder %s20, 6
      %s27 = sphi 0, %s46
      %s28 = sphi 0, %s42
      %s29 = sphi 0, %s38
      %s30 = sphi 0, %s27
      %s31 = sphi 0, %s28
      %s32 = sphi 0, %s29
      %s33 = sphi 0, %s30
      %s34 = sphi 0, %s31
      %s35 = sphi 0, %s32
      %s51 = sphi 0, %s53
      %s54 = sphi 0, %s51
      %s55 = sphi 0, %s54
      %s71 = sphi 0, %s55
      %s79 = sphi 0, %s81
      %s82 = sphi 0, %s79
      %s83 = sphi 0, %s82
      %s99 = sphi 0, %s83
      %s107 = sphi 0, %s109
      %s110 = sphi 0, %s107
      %s111 = sphi 0, %s110
      %s127 = sphi 0, %s111
      %s135 = sphi 0, %s137
      %s138 = sphi 0, %s135
      %s139 = sphi 0, %s138
      %s155 = sphi 0, %s139
      %s163 = sphi 0, %s165
      %s166 = sphi 0, %s163
      %s167 = sphi 0, %s166
      %s183 = sphi 0, %s167
    $region4: #{tpu_custom_call.1} parent=1 // loop_header_branch
      %23 = sbr.rel (%p21) target = $region8
    $region5: #{tpu_custom_call.1} parent=1 // loop_body
      %s25 = ssub.s32 %s20, 1
      %s26 = ssub.s32 %s20, 2
      %s36 = sadd.s32 1, %s29
      %p37 = scmp.ge.s32.totalorder %s36, 1
      %s38 = scalar_select %p37, 0, %s36
      %s39 = sadd.s32 1, %s28
      %s40 = scalar_select %p37, %s39, %s28
      %p41 = scmp.ge.s32.totalorder %s40, 1
      %s42 = scalar_select %p41, 0, %s40
      %s43 = sadd.s32 1, %s27
      %s44 = scalar_select %p41, %s43, %s27
      %p45 = scmp.ge.s32.totalorder %s44, 4
      %s46 = scalar_select %p45, 0, %s44
      %s47 = ssub.s32 %s27, %s46
      %s48 = ssub.s32 %s28, %s42
      %s49 = sor.u32 %s47, %s48
      %p50 = scmp.eq.s32.totalorder %s49, 0
      %s52 = sadd.s32 %s51, 1
      %s53 = scalar_select %p50, %s51, %s52
      %p56 = pneg %p50
      %p57 = scmp.eq.s32.totalorder %s20, 3
      %p58 = por %p56, %p57
      %p59 = scmp.ne.s32.totalorder %s51, %s54
      %p60 = scmp.eq.s32.totalorder %s20, 0
      %p61 = por %p59, %p60
      %p62 = scmp.ne.s32.totalorder %s51, %s54
      %p63 = scmp.eq.s32.totalorder %s25, 3
      %p64 = por %p62, %p63
      %p65 = scmp.ne.s32.totalorder %s54, %s55
      %p66 = scmp.eq.s32.totalorder %s25, 0
      %p67 = por %p65, %p66
      %p68 = scmp.ne.s32.totalorder %s54, %s55
      %p69 = scmp.eq.s32.totalorder %s26, 3
      %p70 = por %p68, %p69
      %p72 = scmp.ne.s32.totalorder %s55, %s71
      %p73 = scmp.eq.s32.totalorder %s26, 0
      %p74 = por %p72, %p73
      %s75 = ssub.s32 %s27, %s46
      %s76 = ssub.s32 %s29, %s38
      %s77 = sor.u32 %s75, %s76
      %p78 = scmp.eq.s32.totalorder %s77, 0
      %s80 = sadd.s32 %s79, 1
      %s81 = scalar_select %p78, %s79, %s80
      %p84 = pneg %p78
      %p85 = scmp.eq.s32.totalorder %s20, 3
      %p86 = por %p84, %p85
      %p87 = scmp.ne.s32.totalorder %s79, %s82
      %p88 = scmp.eq.s32.totalorder %s20, 0
      %p89 = por %p87, %p88
      %p90 = scmp.ne.s32.totalorder %s79, %s82
      %p91 = scmp.eq.s32.totalorder %s25, 3
      %p92 = por %p90, %p91
      %p93 = scmp.ne.s32.totalorder %s82, %s83
      %p94 = scmp.eq.s32.totalorder %s25, 0
      %p95 = por %p93, %p94
      %p96 = scmp.ne.s32.totalorder %s82, %s83
      %p97 = scmp.eq.s32.totalorder %s26, 3
      %p98 = por %p96, %p97
      %p100 = scmp.ne.s32.totalorder %s83, %s99
      %p101 = scmp.eq.s32.totalorder %s26, 0
      %p102 = por %p100, %p101
      %s103 = ssub.s32 %s27, %s46
      %s104 = ssub.s32 %s29, %s38
      %s105 = sor.u32 %s103, %s104
      %p106 = scmp.eq.s32.totalorder %s105, 0
      %s108 = sadd.s32 %s107, 1
      %s109 = scalar_select %p106, %s107, %s108
      %p112 = pneg %p106
      %p113 = scmp.eq.s32.totalorder %s20, 3
      %p114 = por %p112, %p113
      %p115 = scmp.ne.s32.totalorder %s107, %s110
      %p116 = scmp.eq.s32.totalorder %s20, 0
      %p117 = por %p115, %p116
      %p118 = scmp.ne.s32.totalorder %s107, %s110
      %p119 = scmp.eq.s32.totalorder %s25, 3
      %p120 = por %p118, %p119
      %p121 = scmp.ne.s32.totalorder %s110, %s111
      %p122 = scmp.eq.s32.totalorder %s25, 0
      %p123 = por %p121, %p122
      %p124 = scmp.ne.s32.totalorder %s110, %s111
      %p125 = scmp.eq.s32.totalorder %s26, 3
      %p126 = por %p124, %p125
      %p128 = scmp.ne.s32.totalorder %s111, %s127
      %p129 = scmp.eq.s32.totalorder %s26, 0
      %p130 = por %p128, %p129
      %s131 = ssub.s32 %s28, %s42
      %s132 = ssub.s32 %s29, %s38
      %s133 = sor.u32 %s131, %s132
      %p134 = scmp.eq.s32.totalorder %s133, 0
      %s136 = sadd.s32 %s135, 1
      %s137 = scalar_select %p134, %s135, %s136
      %p140 = pneg %p134
      %p141 = scmp.eq.s32.totalorder %s20, 3
      %p142 = por %p140, %p141
      %p143 = scmp.ne.s32.totalorder %s135, %s138
      %p144 = scmp.eq.s32.totalorder %s20, 0
      %p145 = por %p143, %p144
      %p146 = scmp.ne.s32.totalorder %s135, %s138
      %p147 = scmp.eq.s32.totalorder %s25, 3
      %p148 = por %p146, %p147
      %p149 = scmp.ne.s32.totalorder %s138, %s139
      %p150 = scmp.eq.s32.totalorder %s25, 0
      %p151 = por %p149, %p150
      %p152 = scmp.ne.s32.totalorder %s138, %s139
      %p153 = scmp.eq.s32.totalorder %s26, 3
      %p154 = por %p152, %p153
      %p156 = scmp.ne.s32.totalorder %s139, %s155
      %p157 = scmp.eq.s32.totalorder %s26, 0
      %p158 = por %p156, %p157
      %s159 = ssub.s32 %s27, %s46
      %s160 = ssub.s32 %s28, %s42
      %s161 = sor.u32 %s159, %s160
      %p162 = scmp.eq.s32.totalorder %s161, 0
      %s164 = sadd.s32 %s163, 1
      %s165 = scalar_select %p162, %s163, %s164
      %p168 = pneg %p162
      %p169 = scmp.eq.s32.totalorder %s20, 3
      %p170 = por %p168, %p169
      %p171 = scmp.ne.s32.totalorder %s163, %s166
      %p172 = scmp.eq.s32.totalorder %s20, 0
      %p173 = por %p171, %p172
      %p174 = scmp.ne.s32.totalorder %s163, %s166
      %p175 = scmp.eq.s32.totalorder %s25, 3
      %p176 = por %p174, %p175
      %p177 = scmp.ne.s32.totalorder %s166, %s167
      %p178 = scmp.eq.s32.totalorder %s25, 0
      %p179 = por %p177, %p178
      %p180 = scmp.ne.s32.totalorder %s166, %s167
      %p181 = scmp.eq.s32.totalorder %s26, 3
      %p182 = por %p180, %p181
      %p184 = scmp.ne.s32.totalorder %s167, %s183
      %p185 = scmp.eq.s32.totalorder %s26, 0
      %p186 = por %p184, %p185
      %p187 = scmp.le.s32.totalorder 1, %s20
      %p188 = scmp.lt.s32.totalorder %s20, 5
      %p189 = pnand %p187, %p188
      %p190 = pneg %p189
      // Predicated region
      $region9: #{tpu_custom_call.1} parent=5 // pred_check
        _
      $region10: #{tpu_custom_call.1} parent=5 // pred_check_branch
        %192 = sbr.rel (%p189) target = $region12
      $region11: #{tpu_custom_call.1} parent=5 // pred_region
        %s193 = ssub.s32 %s20, 1
        // Predicated region
        $region13: #{tpu_custom_call.1} parent=11 // pred_check
          %p194 = pneg %p151
        $region14: #{tpu_custom_call.1} parent=11 // pred_check_branch
          %196 = sbr.rel (%p194) target = $region16
        $region15: #{tpu_custom_call.1} parent=11 // pred_region
          %s198 = ssub.s32 128, 128
          %199 = vsyncadd [#allocation12], %s198
          %s200 = sadd.s32 %s32, %s31
          %s201 = smul.addr %s200, 128
          %s202 = scalar_lea.hbm %s3, %s201
          %s204 = sshll.u32 [#allocation11], 4
          %s205 = int_to_ptr.vmem [resolvable:$true] %s204
          %207 = dma.hbm_to_vmem [thread:$0]  %s202, 128, %s205, [#allocation12]
        $region16: #{tpu_custom_call.1} parent=11 // pred_fallthru
          _
      $region12: #{tpu_custom_call.1} parent=5 // pred_fallthru
        _
      %p208 = scmp.lt.s32.totalorder %s20, 4
      // Predicated region
      $region17: #{tpu_custom_call.1} parent=5 // pred_check
        %p209 = pneg %p208
      $region18: #{tpu_custom_call.1} parent=5 // pred_check_branch
        %211 = sbr.rel (%p209) target = $region20
      $region19: #{tpu_custom_call.1} parent=5 // pred_region
        // Predicated region
        $region21: #{tpu_custom_call.1} parent=19 // pred_check
          %p212 = pneg %p61
        $region22: #{tpu_custom_call.1} parent=19 // pred_check_branch
          %214 = sbr.rel (%p212) target = $region24
        $region23: #{tpu_custom_call.1} parent=19 // pred_region
          %s215 = sand.u32 %s51, 1
          %s216 = scalar_lea.sflag [#allocation6], %s215
          %s217 = sand.u32 %s51, 1
          %s218 = smul.addr %s217, 16
          %s219 = scalar_lea.vmem [#allocation5], %s218
          %s220 = smul.u32 2, %s27
          %s222 = ssub.s32 256, 256
          %223 = vsyncadd %s216, %s222
          %s224 = sadd.s32 %s28, %s220
          %s225 = smul.addr %s224, 128
          %s226 = scalar_lea.hbm %s0, %s225
          %s227 = sshll.u32 %s219, 4
          %s228 = int_to_ptr.vmem [resolvable:$true] %s227
          %233 = dma.hbm_to_vmem [thread:$0]  %s226, 256, %s228, %s216, 128, 128, 8
        $region24: #{tpu_custom_call.1} parent=19 // pred_fallthru
          _
        // Predicated region
        $region25: #{tpu_custom_call.1} parent=19 // pred_check
          %p234 = pneg %p89
        $region26: #{tpu_custom_call.1} parent=19 // pred_check_branch
          %236 = sbr.rel (%p234) target = $region28
        $region27: #{tpu_custom_call.1} parent=19 // pred_region
          %s237 = sand.u32 %s20, 1
          %s238 = scalar_lea.sflag [#allocation9], %s237
          %s239 = sand.u32 %s79, 1
          %s240 = smul.addr %s239, 16
          %s241 = scalar_lea.vmem [#allocation8], %s240
          %s242 = smul.u32 2, %s27
          %s244 = ssub.s32 256, 256
          %245 = vsyncadd %s238, %s244
          %s246 = sadd.s32 %s29, %s242
          %s247 = smul.addr %s246, 128
          %s248 = scalar_lea.hbm %s1, %s247
          %s249 = sshll.u32 %s241, 4
          %s250 = int_to_ptr.vmem [resolvable:$true] %s249
          %255 = dma.hbm_to_vmem [thread:$0]  %s248, 256, %s250, %s238, 128, 128, 8
        $region28: #{tpu_custom_call.1} parent=19 // pred_fallthru
          _
        // Predicated region
        $region29: #{tpu_custom_call.1} parent=19 // pred_check
          %p256 = pneg %p117
        $region30: #{tpu_custom_call.1} parent=19 // pred_check_branch
          %258 = sbr.rel (%p256) target = $region32
        $region31: #{tpu_custom_call.1} parent=19 // pred_region
          %s259 = sand.u32 %s20, 1
          %s260 = scalar_lea.sflag [#allocation9], %s259
          %s261 = sand.u32 %s107, 1
          %s262 = smul.addr %s261, 16
          %s263 = scalar_lea.vmem [#allocation10], %s262
          %s264 = smul.u32 2, %s27
          %s266 = ssub.s32 256, 256
          %267 = vsyncadd %s260, %s266
          %s268 = sadd.s32 %s29, %s264
          %s269 = smul.addr %s268, 128
          %s270 = scalar_lea.hbm %s2, %s269
          %s271 = sshll.u32 %s263, 4
          %s272 = int_to_ptr.vmem [resolvable:$true] %s271
          %277 = dma.hbm_to_vmem [thread:$0]  %s270, 256, %s272, %s260, 128, 128, 8
        $region32: #{tpu_custom_call.1} parent=19 // pred_fallthru
          _
      $region20: #{tpu_custom_call.1} parent=5 // pred_fallthru
        _
      %p278 = scmp.le.s32.totalorder 1, %s20
      %p279 = scmp.lt.s32.totalorder %s20, 5
      %p280 = pnand %p278, %p279
      %p281 = pneg %p280
      // Predicated region
      $region33: #{tpu_custom_call.1} parent=5 // pred_check
        _
      $region34: #{tpu_custom_call.1} parent=5 // pred_check_branch
        %283 = sbr.rel (%p280) target = $region36
      $region35: #{tpu_custom_call.1} parent=5 // pred_region
        %s284 = ssub.s32 %s20, 1
        %s285 = sand.u32 %s54, 1
        %s286 = scalar_lea.sflag [#allocation6], %s285
        %s287 = sand.u32 %s54, 1
        %s288 = smul.addr %s287, 16
        %s289 = scalar_lea.vmem [#allocation5], %s288
        // Predicated region
        $region37: #{tpu_custom_call.1} parent=35 // pred_check
          %p290 = pneg %p67
        $region38: #{tpu_custom_call.1} parent=35 // pred_check_branch
          %292 = sbr.rel (%p290) target = $region40
        $region39: #{tpu_custom_call.1} parent=35 // pred_region
          %293 = dma.done %s286, 256
        $region40: #{tpu_custom_call.1} parent=35 // pred_fallthru
          _
        %s294 = sand.u32 %s25, 1
        %s295 = scalar_lea.sflag [#allocation9], %s294
        %s296 = sand.u32 %s82, 1
        %s297 = smul.addr %s296, 16
        %s298 = scalar_lea.vmem [#allocation8], %s297
        // Predicated region
        $region41: #{tpu_custom_call.1} parent=35 // pred_check
          %p299 = pneg %p95
        $region42: #{tpu_custom_call.1} parent=35 // pred_check_branch
          %301 = sbr.rel (%p299) target = $region44
        $region43: #{tpu_custom_call.1} parent=35 // pred_region
          %302 = dma.done %s295, 256
        $region44: #{tpu_custom_call.1} parent=35 // pred_fallthru
          _
        %s303 = sand.u32 %s25, 1
        %s304 = scalar_lea.sflag [#allocation9], %s303
        %s305 = sand.u32 %s110, 1
        %s306 = smul.addr %s305, 16
        %s307 = scalar_lea.vmem [#allocation10], %s306
        // Predicated region
        $region45: #{tpu_custom_call.1} parent=35 // pred_check
          %p308 = pneg %p123
        $region46: #{tpu_custom_call.1} parent=35 // pred_check_branch
          %310 = sbr.rel (%p308) target = $region48
        $region47: #{tpu_custom_call.1} parent=35 // pred_region
          %311 = dma.done %s304, 256
        $region48: #{tpu_custom_call.1} parent=35 // pred_fallthru
          _
        // Predicated region
        $region49: #{tpu_custom_call.1} parent=35 // pred_check
          %p312 = pneg %p151
        $region50: #{tpu_custom_call.1} parent=35 // pred_check_branch
          %314 = sbr.rel (%p312) target = $region52
        $region51: #{tpu_custom_call.1} parent=35 // pred_region
          %315 = dma.done [#allocation12], 128
        $region52: #{tpu_custom_call.1} parent=35 // pred_fallthru
          _
        %s316 = sand.u32 %s54, 1
        %s317 = scalar_lea.sflag [#allocation6], %s316
        %s318 = sand.u32 %s54, 1
        %s319 = smul.addr %s318, 16
        %s320 = scalar_lea.vmem [#allocation5], %s319
        %p321 = pneg %p67
        %p322 = pneg %p64
        %s323 = sand.u32 %s25, 1
        %s324 = scalar_lea.sflag [#allocation9], %s323
        %s325 = sand.u32 %s82, 1
        %s326 = smul.addr %s325, 16
        %s327 = scalar_lea.vmem [#allocation8], %s326
        %p328 = pneg %p95
        %p329 = pneg %p92
        %s330 = sand.u32 %s25, 1
        %s331 = scalar_lea.sflag [#allocation9], %s330
        %s332 = sand.u32 %s110, 1
        %s333 = smul.addr %s332, 16
        %s334 = scalar_lea.vmem [#allocation10], %s333
        %p335 = pneg %p123
        %p336 = pneg %p120
        %p337 = pneg %p151
        %p338 = pneg %p148
        %p339 = pneg %p179
        %p340 = pneg %p176
        %s341 = sand.u32 %s166, 1
        %s342 = scalar_lea.sflag [#allocation7], %s341
        %s343 = sand.u32 %s166, 1
        %s344 = smul.addr %s343, 16
        %s345 = scalar_lea.vmem [#allocation13], %s344
        %s346 = smul.u32 2, %s30
        %s347 = smul.u32 2, %s30
        %s348 = smul.u32 2, %s30
        %s349 = smul.u32 2, %s30
        %p350 = scmp.eq.s32.totalorder %s32, 0
        // Predicated region
        $region53: #{tpu_custom_call.1} parent=35 // pred_check
          %p351 = pneg %p350
        $region54: #{tpu_custom_call.1} parent=35 // pred_check_branch
          %353 = sbr.rel (%p351) target = $region56
        $region55: #{tpu_custom_call.1} parent=35 // pred_region
          %vm354 = vcmask 7168
          %355 = vst.msk [vmem:[#allocation2] sm:$0xff] %vm354, -inf
          %356 = vst.msk [vmem:[#allocation2 + $0x8] sm:$0xff] %vm354, -inf
          %357 = vst.msk [vmem:[#allocation3] sm:$0xff] %vm354, 0.0
          %358 = vst.msk [vmem:[#allocation3 + $0x8] sm:$0xff] %vm354, 0.0
          %vm359 = vcmask 64512
          %360 = vst.msk [vmem:[#allocation4] sm:$0xff] %vm359, 0.0
          %361 = vst.msk [vmem:[#allocation4 + $0x8] sm:$0xff] %vm359, 0.0
        $region56: #{tpu_custom_call.1} parent=35 // pred_fallthru
          _
        %v362 = vld [vmem:[%s289] sm:$0xff]
        %v363 = vld [vmem:[%s289 + $0x8] sm:$0xff]
        %v364 = vld [vmem:[%s298] sm:$0xff]
        %v365 = vld [vmem:[%s298 + $0x8] sm:$0xff]
        %v366 = vld [vmem:[#allocation11] sm:$0xff]
        %vm367 = vcmask 64512
        %v369 = vsel %vm367, %v362, 0
        %v372 = vsel %vm367, %v364, 0
        %374 = vmatprep.subr.mxu0 0.0
        %375 = vmatpush1.xpose.msra.mxu0 0.0
        %376 = vmatprep.subr.mxu0 0.0
        %377 = vmatpush1.xpose.msra.mxu0 0.0
        %378 = vmatprep.subr.mxu0 0.0
        %379 = vmatpush1.xpose.msra.mxu0 0.0
        %380 = vmatprep.subr.mxu0 0.0
        %381 = vmatpush1.xpose.msra.mxu0 0.0
        %382 = vmatprep.subr.mxu0 0.0
        %383 = vmatpush1.xpose.msra.mxu0 0.0
        %384 = vmatprep.subr.mxu0 0.0
        %385 = vmatpush1.xpose.msra.mxu0 0.0
        %386 = vmatprep.subr.mxu0 0.0
        %387 = vmatpush1.xpose.msra.mxu0 0.0
        %388 = vmatprep.subr.mxu0 0.0
        %389 = vmatpush1.xpose.msra.mxu0 0.0
        %390 = vmatprep.subr.mxu0 0.0
        %391 = vmatpush1.xpose.msra.mxu0 0.0
        %392 = vmatprep.subr.mxu0 0.0
        %393 = vmatpush1.xpose.msra.mxu0 0.0
        %394 = vmatprep.subr.mxu0 0.0
        %395 = vmatpush1.xpose.msra.mxu0 0.0
        %396 = vmatprep.subr.mxu0 0.0
        %397 = vmatpush1.xpose.msra.mxu0 0.0
        %398 = vmatprep.subr.mxu0 0.0
        %399 = vmatpush1.xpose.msra.mxu0 0.0
        %400 = vmatprep.subr.mxu0 0.0
        %401 = vmatpush1.xpose.msra.mxu0 0.0
        %402 = vmatprep.subr.mxu0 0.0
        %403 = vmatpush1.xpose.msra.mxu0 0.0
        %404 = vmatprep.subr.mxu0 0.0
        %405 = vmatpush1.xpose.msra.mxu0 %v372
        %406 = vmatprep.subr.mxu0 0.0
        %407 = vmatpush2.xpose.msra.mxu0 0.0
        %408 = vmatprep.subr.mxu0 0.0
        %409 = vmatpush2.xpose.msra.mxu0 0.0
        %410 = vmatprep.subr.mxu0 0.0
        %411 = vmatpush2.xpose.msra.mxu0 0.0
        %412 = vmatprep.subr.mxu0 0.0
        %413 = vmatpush2.xpose.msra.mxu0 0.0
        %414 = vmatprep.subr.mxu0 0.0
        %415 = vmatpush2.xpose.msra.mxu0 0.0
        %416 = vmatprep.subr.mxu0 0.0
        %417 = vmatpush2.xpose.msra.mxu0 0.0
        %418 = vmatprep.subr.mxu0 0.0
        %419 = vmatpush2.xpose.msra.mxu0 0.0
        %420 = vmatprep.subr.mxu0 0.0
        %421 = vmatpush2.xpose.msra.mxu0 0.0
        %422 = vmatprep.subr.mxu0 0.0
        %423 = vmatpush2.xpose.msra.mxu0 0.0
        %424 = vmatprep.subr.mxu0 0.0
        %425 = vmatpush2.xpose.msra.mxu0 0.0
        %426 = vmatprep.subr.mxu0 0.0
        %427 = vmatpush2.xpose.msra.mxu0 0.0
        %428 = vmatprep.subr.mxu0 0.0
        %429 = vmatpush2.xpose.msra.mxu0 0.0
        %430 = vmatprep.subr.mxu0 0.0
        %431 = vmatpush2.xpose.msra.mxu0 0.0
        %432 = vmatprep.subr.mxu0 0.0
        %433 = vmatpush2.xpose.msra.mxu0 0.0
        %434 = vmatprep.subr.mxu0 0.0
        %435 = vmatpush2.xpose.msra.mxu0 0.0
        %436 = vmatprep.subr.mxu0 0.0
        %437 = vmatpush2.xpose.msra.mxu0 0.0
        %438 = vmatprep.mubr.f32.mxu0 0.0
        %439 = vmatmul.mubr.f32.gmra.mxu0 %v369
        %v440 = vpop.f32.mrf.mxu0
        %v441 = vadd.f32 %v366, %v440
        %v442 = vpop.f32.mrf.mxu0
        %443 = vdwg.mxu0
        %v445 = vsel %vm367, %v363, 0
        %v448 = vsel %vm367, %v365, 0
        %450 = vmatprep.subr.mxu0 0.0
        %451 = vmatpush1.xpose.msra.mxu0 0.0
        %452 = vmatprep.subr.mxu0 0.0
        %453 = vmatpush1.xpose.msra.mxu0 0.0
        %454 = vmatprep.subr.mxu0 0.0
        %455 = vmatpush1.xpose.msra.mxu0 0.0
        %456 = vmatprep.subr.mxu0 0.0
        %457 = vmatpush1.xpose.msra.mxu0 0.0
        %458 = vmatprep.subr.mxu0 0.0
        %459 = vmatpush1.xpose.msra.mxu0 0.0
        %460 = vmatprep.subr.mxu0 0.0
        %461 = vmatpush1.xpose.msra.mxu0 0.0
        %462 = vmatprep.subr.mxu0 0.0
        %463 = vmatpush1.xpose.msra.mxu0 0.0
        %464 = vmatprep.subr.mxu0 0.0
        %465 = vmatpush1.xpose.msra.mxu0 0.0
        %466 = vmatprep.subr.mxu0 0.0
        %467 = vmatpush1.xpose.msra.mxu0 0.0
        %468 = vmatprep.subr.mxu0 0.0
        %469 = vmatpush1.xpose.msra.mxu0 0.0
        %470 = vmatprep.subr.mxu0 0.0
        %471 = vmatpush1.xpose.msra.mxu0 0.0
        %472 = vmatprep.subr.mxu0 0.0
        %473 = vmatpush1.xpose.msra.mxu0 0.0
        %474 = vmatprep.subr.mxu0 0.0
        %475 = vmatpush1.xpose.msra.mxu0 0.0
        %476 = vmatprep.subr.mxu0 0.0
        %477 = vmatpush1.xpose.msra.mxu0 0.0
        %478 = vmatprep.subr.mxu0 0.0
        %479 = vmatpush1.xpose.msra.mxu0 0.0
        %480 = vmatprep.subr.mxu0 0.0
        %481 = vmatpush1.xpose.msra.mxu0 %v448
        %482 = vmatprep.subr.mxu0 0.0
        %483 = vmatpush2.xpose.msra.mxu0 0.0
        %484 = vmatprep.subr.mxu0 0.0
        %485 = vmatpush2.xpose.msra.mxu0 0.0
        %486 = vmatprep.subr.mxu0 0.0
        %487 = vmatpush2.xpose.msra.mxu0 0.0
        %488 = vmatprep.subr.mxu0 0.0
        %489 = vmatpush2.xpose.msra.mxu0 0.0
        %490 = vmatprep.subr.mxu0 0.0
        %491 = vmatpush2.xpose.msra.mxu0 0.0
        %492 = vmatprep.subr.mxu0 0.0
        %493 = vmatpush2.xpose.msra.mxu0 0.0
        %494 = vmatprep.subr.mxu0 0.0
        %495 = vmatpush2.xpose.msra.mxu0 0.0
        %496 = vmatprep.subr.mxu0 0.0
        %497 = vmatpush2.xpose.msra.mxu0 0.0
        %498 = vmatprep.subr.mxu0 0.0
        %499 = vmatpush2.xpose.msra.mxu0 0.0
        %500 = vmatprep.subr.mxu0 0.0
        %501 = vmatpush2.xpose.msra.mxu0 0.0
        %502 = vmatprep.subr.mxu0 0.0
        %503 = vmatpush2.xpose.msra.mxu0 0.0
        %504 = vmatprep.subr.mxu0 0.0
        %505 = vmatpush2.xpose.msra.mxu0 0.0
        %506 = vmatprep.subr.mxu0 0.0
        %507 = vmatpush2.xpose.msra.mxu0 0.0
        %508 = vmatprep.subr.mxu0 0.0
        %509 = vmatpush2.xpose.msra.mxu0 0.0
        %510 = vmatprep.subr.mxu0 0.0
        %511 = vmatpush2.xpose.msra.mxu0 0.0
        %512 = vmatprep.subr.mxu0 0.0
        %513 = vmatpush2.xpose.msra.mxu0 0.0
        %514 = vmatprep.mubr.f32.mxu0 0.0
        %515 = vmatmul.mubr.f32.gmra.mxu0 %v445
        %v516 = vpop.f32.mrf.mxu0
        %v517 = vadd.f32 %v366, %v516
        %v518 = vpop.f32.mrf.mxu0
        %519 = vdwg.mxu0
        %v520 = vld [vmem:[#allocation2] sm:$0xff]
        %v521 = vld [vmem:[#allocation2 + $0x8] sm:$0xff]
        %v522 = vsel %vm367, %v441, -inf
        %523 = vmax.xlane.f32.xlu0 %v522
        %v524 = vpop.xlane.xlu0 %523
        %v525 = vsel %vm367, %v517, -inf
        %526 = vmax.xlane.f32.xlu0 %v525
        %v527 = vpop.xlane.xlu0 %526
        %v528 = vmax.f32 %v520, %v524
        %v529 = vmax.f32 %v521, %v527
        %v530 = vsub.f32 %v520, %v528
        %v531 = vsub.f32 %v521, %v529
        %v532 = vmul.f32 %v530, 1.442695
        %v533 = vpow.pop %v532
        %v534 = vmul.f32 %v531, 1.442695
        %v535 = vpow.pop %v534
        %537 = vset.pattern.permute.xlu0 0
        %538 = vperm.xlu0 %537, %v528
        %v539 = vpop.permute.xlu0 %538
        %542 = vset.pattern.permute.xlu0 0
        %543 = vperm.xlu0 %542, %v529
        %v544 = vpop.permute.xlu0 %543
        %v546 = vsub.f32 %v441, %v539
        %v547 = vsub.f32 %v517, %v544
        %v548 = vmul.f32 %v546, 1.442695
        %v549 = vpow.pop %v548
        %v550 = vmul.f32 %v547, 1.442695
        %v551 = vpow.pop %v550
        %v552 = vld [vmem:[#allocation3] sm:$0xff]
        %v553 = vld [vmem:[#allocation3 + $0x8] sm:$0xff]
        %v554 = vmul.f32 %v533, %v552
        %v555 = vmul.f32 %v535, %v553
        %v556 = vsel %vm367, %v549, 0.0
        %557 = vadd.xlane.f32.xlu0 %v556
        %v558 = vpop.xlane.xlu0 %557
        %v559 = vsel %vm367, %v551, 0.0
        %560 = vadd.xlane.f32.xlu0 %v559
        %v561 = vpop.xlane.xlu0 %560
        %v562 = vadd.f32 %v554, %v558
        %v563 = vadd.f32 %v555, %v561
        %vm564 = vcmask 7168
        %565 = vst.msk [vmem:[#allocation3] sm:$0xff] %vm564, %v562
        %566 = vst.msk [vmem:[#allocation3 + $0x8] sm:$0xff] %vm564, %v563
        %v567 = vld [vmem:[#allocation4] sm:$0xff]
        %v568 = vld [vmem:[#allocation4 + $0x8] sm:$0xff]
        %570 = vset.pattern.permute.xlu0 0
        %571 = vperm.xlu0 %570, %v533
        %v572 = vpop.permute.xlu0 %571
        %575 = vset.pattern.permute.xlu0 0
        %576 = vperm.xlu0 %575, %v535
        %v577 = vpop.permute.xlu0 %576
        %v579 = vmul.f32 %v572, %v567
        %v580 = vmul.f32 %v577, %v568
        %v581 = vld [vmem:[%s307] sm:$0xff]
        %v582 = vld [vmem:[%s307 + $0x8] sm:$0xff]
        %v584 = vsel %vm367, %v549, 0
        %586 = vmatprep.subr.mxu0 0.0
        %587 = vmatpush1.msra.mxu0 0.0
        %588 = vmatprep.subr.mxu0 0.0
        %589 = vmatpush1.msra.mxu0 0.0
        %590 = vmatprep.subr.mxu0 0.0
        %591 = vmatpush1.msra.mxu0 0.0
        %592 = vmatprep.subr.mxu0 0.0
        %593 = vmatpush1.msra.mxu0 0.0
        %594 = vmatprep.subr.mxu0 0.0
        %595 = vmatpush1.msra.mxu0 0.0
        %596 = vmatprep.subr.mxu0 0.0
        %597 = vmatpush1.msra.mxu0 0.0
        %598 = vmatprep.subr.mxu0 0.0
        %599 = vmatpush1.msra.mxu0 0.0
        %600 = vmatprep.subr.mxu0 0.0
        %601 = vmatpush1.msra.mxu0 0.0
        %602 = vmatprep.subr.mxu0 0.0
        %603 = vmatpush1.msra.mxu0 0.0
        %604 = vmatprep.subr.mxu0 0.0
        %605 = vmatpush1.msra.mxu0 0.0
        %606 = vmatprep.subr.mxu0 0.0
        %607 = vmatpush1.msra.mxu0 0.0
        %608 = vmatprep.subr.mxu0 0.0
        %609 = vmatpush1.msra.mxu0 0.0
        %610 = vmatprep.subr.mxu0 0.0
        %611 = vmatpush1.msra.mxu0 0.0
        %612 = vmatprep.subr.mxu0 0.0
        %613 = vmatpush1.msra.mxu0 0.0
        %614 = vmatprep.subr.mxu0 0.0
        %615 = vmatpush1.msra.mxu0 0.0
        %616 = vmatprep.subr.mxu0 0.0
        %617 = vmatpush1.msra.mxu0 %v581
        %618 = vmatprep.subr.mxu0 0.0
        %619 = vmatpush2.msra.mxu0 0.0
        %620 = vmatprep.subr.mxu0 0.0
        %621 = vmatpush2.msra.mxu0 0.0
        %622 = vmatprep.subr.mxu0 0.0
        %623 = vmatpush2.msra.mxu0 0.0
        %624 = vmatprep.subr.mxu0 0.0
        %625 = vmatpush2.msra.mxu0 0.0
        %626 = vmatprep.subr.mxu0 0.0
        %627 = vmatpush2.msra.mxu0 0.0
        %628 = vmatprep.subr.mxu0 0.0
        %629 = vmatpush2.msra.mxu0 0.0
        %630 = vmatprep.subr.mxu0 0.0
        %631 = vmatpush2.msra.mxu0 0.0
        %632 = vmatprep.subr.mxu0 0.0
        %633 = vmatpush2.msra.mxu0 0.0
        %634 = vmatprep.subr.mxu0 0.0
        %635 = vmatpush2.msra.mxu0 0.0
        %636 = vmatprep.subr.mxu0 0.0
        %637 = vmatpush2.msra.mxu0 0.0
        %638 = vmatprep.subr.mxu0 0.0
        %639 = vmatpush2.msra.mxu0 0.0
        %640 = vmatprep.subr.mxu0 0.0
        %641 = vmatpush2.msra.mxu0 0.0
        %642 = vmatprep.subr.mxu0 0.0
        %643 = vmatpush2.msra.mxu0 0.0
        %644 = vmatprep.subr.mxu0 0.0
        %645 = vmatpush2.msra.mxu0 0.0
        %646 = vmatprep.subr.mxu0 0.0
        %647 = vmatpush2.msra.mxu0 0.0
        %648 = vmatprep.subr.mxu0 0.0
        %649 = vmatpush2.msra.mxu0 0.0
        %650 = vmatprep.mubr.f32.mxu0 0.0
        %651 = vmatmul.mubr.f32.gmra.mxu0 %v584
        %v652 = vpop.f32.mrf.mxu0
        %v653 = vadd.f32 0.0, %v652
        %v654 = vpop.f32.mrf.mxu0
        %655 = vdwg.mxu0
        %v657 = vsel %vm367, %v551, 0
        %659 = vmatprep.subr.mxu0 0.0
        %660 = vmatpush1.msra.mxu0 0.0
        %661 = vmatprep.subr.mxu0 0.0
        %662 = vmatpush1.msra.mxu0 0.0
        %663 = vmatprep.subr.mxu0 0.0
        %664 = vmatpush1.msra.mxu0 0.0
        %665 = vmatprep.subr.mxu0 0.0
        %666 = vmatpush1.msra.mxu0 0.0
        %667 = vmatprep.subr.mxu0 0.0
        %668 = vmatpush1.msra.mxu0 0.0
        %669 = vmatprep.subr.mxu0 0.0
        %670 = vmatpush1.msra.mxu0 0.0
        %671 = vmatprep.subr.mxu0 0.0
        %672 = vmatpush1.msra.mxu0 0.0
        %673 = vmatprep.subr.mxu0 0.0
        %674 = vmatpush1.msra.mxu0 0.0
        %675 = vmatprep.subr.mxu0 0.0
        %676 = vmatpush1.msra.mxu0 0.0
        %677 = vmatprep.subr.mxu0 0.0
        %678 = vmatpush1.msra.mxu0 0.0
        %679 = vmatprep.subr.mxu0 0.0
        %680 = vmatpush1.msra.mxu0 0.0
        %681 = vmatprep.subr.mxu0 0.0
        %682 = vmatpush1.msra.mxu0 0.0
        %683 = vmatprep.subr.mxu0 0.0
        %684 = vmatpush1.msra.mxu0 0.0
        %685 = vmatprep.subr.mxu0 0.0
        %686 = vmatpush1.msra.mxu0 0.0
        %687 = vmatprep.subr.mxu0 0.0
        %688 = vmatpush1.msra.mxu0 0.0
        %689 = vmatprep.subr.mxu0 0.0
        %690 = vmatpush1.msra.mxu0 %v582
        %691 = vmatprep.subr.mxu0 0.0
        %692 = vmatpush2.msra.mxu0 0.0
        %693 = vmatprep.subr.mxu0 0.0
        %694 = vmatpush2.msra.mxu0 0.0
        %695 = vmatprep.subr.mxu0 0.0
        %696 = vmatpush2.msra.mxu0 0.0
        %697 = vmatprep.subr.mxu0 0.0
        %698 = vmatpush2.msra.mxu0 0.0
        %699 = vmatprep.subr.mxu0 0.0
        %700 = vmatpush2.msra.mxu0 0.0
        %701 = vmatprep.subr.mxu0 0.0
        %702 = vmatpush2.msra.mxu0 0.0
        %703 = vmatprep.subr.mxu0 0.0
        %704 = vmatpush2.msra.mxu0 0.0
        %705 = vmatprep.subr.mxu0 0.0
        %706 = vmatpush2.msra.mxu0 0.0
        %707 = vmatprep.subr.mxu0 0.0
        %708 = vmatpush2.msra.mxu0 0.0
        %709 = vmatprep.subr.mxu0 0.0
        %710 = vmatpush2.msra.mxu0 0.0
        %711 = vmatprep.subr.mxu0 0.0
        %712 = vmatpush2.msra.mxu0 0.0
        %713 = vmatprep.subr.mxu0 0.0
        %714 = vmatpush2.msra.mxu0 0.0
        %715 = vmatprep.subr.mxu0 0.0
        %716 = vmatpush2.msra.mxu0 0.0
        %717 = vmatprep.subr.mxu0 0.0
        %718 = vmatpush2.msra.mxu0 0.0
        %719 = vmatprep.subr.mxu0 0.0
        %720 = vmatpush2.msra.mxu0 0.0
        %721 = vmatprep.subr.mxu0 0.0
        %722 = vmatpush2.msra.mxu0 0.0
        %723 = vmatprep.mubr.f32.mxu0 0.0
        %724 = vmatmul.mubr.f32.gmra.mxu0 %v657
        %v725 = vpop.f32.mrf.mxu0
        %v726 = vadd.f32 0.0, %v725
        %v727 = vpop.f32.mrf.mxu0
        %728 = vdwg.mxu0
        %v729 = vadd.f32 %v579, %v653
        %v730 = vadd.f32 %v580, %v726
        %731 = vst.msk [vmem:[#allocation4] sm:$0xff] %vm367, %v729
        %732 = vst.msk [vmem:[#allocation4 + $0x8] sm:$0xff] %vm367, %v730
        %733 = vst.msk [vmem:[#allocation2] sm:$0xff] %vm564, %v528
        %734 = vst.msk [vmem:[#allocation2 + $0x8] sm:$0xff] %vm564, %v529
        // Predicated region
        $region57: #{tpu_custom_call.1} parent=35 // pred_check
          %p735 = pneg %p350
        $region58: #{tpu_custom_call.1} parent=35 // pred_check_branch
          %737 = sbr.rel (%p735) target = $region60
        $region59: #{tpu_custom_call.1} parent=35 // pred_region
          %v738 = vld [vmem:[#allocation3] sm:$0xff]
          %v739 = vld [vmem:[#allocation3 + $0x8] sm:$0xff]
          %v740 = vrcp.pop %v738
          %v741 = vrcp.pop %v739
          %v742 = vld [vmem:[#allocation4] sm:$0xff]
          %v743 = vld [vmem:[#allocation4 + $0x8] sm:$0xff]
          %745 = vset.pattern.permute.xlu0 0
          %746 = vperm.xlu0 %745, %v740
          %v747 = vpop.permute.xlu0 %746
          %750 = vset.pattern.permute.xlu0 0
          %751 = vperm.xlu0 %750, %v741
          %v752 = vpop.permute.xlu0 %751
          %v754 = vmul.f32 %v742, %v747
          %v755 = vmul.f32 %v743, %v752
          %756 = vst.msk [vmem:[%s345] sm:$0xff] %vm367, %v754
          %757 = vst.msk [vmem:[%s345 + $0x8] sm:$0xff] %vm367, %v755
        $region60: #{tpu_custom_call.1} parent=35 // pred_fallthru
          _
        %s758 = sand.u32 %s166, 1
        %s759 = scalar_lea.sflag [#allocation7], %s758
        %s760 = sand.u32 %s166, 1
        %s761 = smul.addr %s760, 16
        %s762 = scalar_lea.vmem [#allocation13], %s761
        // Predicated region
        $region61: #{tpu_custom_call.1} parent=35 // pred_check
          %p763 = pneg %p176
        $region62: #{tpu_custom_call.1} parent=35 // pred_check_branch
          %765 = sbr.rel (%p763) target = $region64
        $region63: #{tpu_custom_call.1} parent=35 // pred_region
          %s766 = smul.u32 2, %s30
          %s768 = ssub.s32 256, 256
          %769 = vsyncadd %s759, %s768
          %s770 = sadd.s32 %s31, %s766
          %s771 = smul.addr %s770, 128
          %s772 = scalar_lea.hbm %s4, %s771
          %s773 = sshll.u32 %s762, 4
          %s774 = int_to_ptr.vmem [resolvable:$true] %s773
          %779 = dma.vmem_to_hbm [thread:$0]  %s774, 256, %s772, %s759, 128, 128, 8
        $region64: #{tpu_custom_call.1} parent=35 // pred_fallthru
          _
      $region36: #{tpu_custom_call.1} parent=5 // pred_fallthru
        _
      %p780 = scmp.le.s32.totalorder 2, %s20
      // Predicated region
      $region65: #{tpu_custom_call.1} parent=5 // pred_check
        %p781 = pneg %p780
      $region66: #{tpu_custom_call.1} parent=5 // pred_check_branch
        %783 = sbr.rel (%p781) target = $region68
      $region67: #{tpu_custom_call.1} parent=5 // pred_region
        %s784 = ssub.s32 %s20, 2
        // Predicated region
        $region69: #{tpu_custom_call.1} parent=67 // pred_check
          %p785 = pneg %p182
        $region70: #{tpu_custom_call.1} parent=67 // pred_check_branch
          %787 = sbr.rel (%p785) target = $region72
        $region71: #{tpu_custom_call.1} parent=67 // pred_region
          %s788 = sand.u32 %s167, 1
          %s789 = scalar_lea.sflag [#allocation7], %s788
          %s790 = sand.u32 %s167, 1
          %s791 = smul.addr %s790, 16
          %s792 = scalar_lea.vmem [#allocation13], %s791
          %793 = dma.done %s789, 256
        $region72: #{tpu_custom_call.1} parent=67 // pred_fallthru
          _
      $region68: #{tpu_custom_call.1} parent=5 // pred_fallthru
        _
    $region6: #{tpu_custom_call.1} parent=1 // loop_footer
      %s24 = sadd.s32 1, %s20
    $region7: #{tpu_custom_call.1} parent=1 // loop_footer_branch
      %19 = sbr.rel target = $region3
    $region8: #{tpu_custom_call.1} parent=1 // loop_exit
      _
    %794 = vsyncpa [#allocation6], 1
    %s795 = scalar_lea.sflag [#allocation6], 1
    %796 = vsyncpa %s795, 1
    %797 = vsyncpa [#allocation9], 1
    %s798 = scalar_lea.sflag [#allocation9], 1
    %799 = vsyncpa %s798, 1
    %800 = vsyncpa [#allocation12], 1
    %801 = vsyncpa [#allocation7], 1
    %s802 = scalar_lea.sflag [#allocation7], 1
    %803 = vsyncpa %s802, 1

</llo_original>
